<compile_context>
chip_gen: v7x
topology: tpu7x:2x2x1
jax: 0.10.0
libtpu: 0.0.40
codegen_flags: <defaults>
</compile_context>

<pallas_src>
import functools

import jax
import jax.numpy as jnp
from jax.experimental import pallas as pl
from jax.experimental.pallas import tpu as pltpu


def _round_up(x, m):
    return ((x + m - 1) // m) * m


def actor_kernel(x_ref, w1_ref, b1_ref, w2_ref, b2_ref, w3_ref, b3_ref,
                 o_ref, *, max_action):
    x = x_ref[...]

    # fc1 + relu  (LHS cast to weight dtype so bf16 weights feed the MXU directly;
    # accumulation is f32 via preferred_element_type)
    h1 = jnp.dot(x.astype(w1_ref.dtype), w1_ref[...],
                 preferred_element_type=jnp.float32)
    h1 = jnp.maximum(h1 + b1_ref[...], 0.0)

    # fc2 + relu
    h2 = jnp.dot(h1.astype(w2_ref.dtype), w2_ref[...],
                 preferred_element_type=jnp.float32)
    h2 = jnp.maximum(h2 + b2_ref[...], 0.0)

    # fc3 + tanh, scaled by max_action (tanh lands on the EUP slot -> ~free)
    h3 = jnp.dot(h2.astype(w3_ref.dtype), w3_ref[...],
                 preferred_element_type=jnp.float32)
    o_ref[...] = (jnp.tanh(h3 + b3_ref[...]) * max_action).astype(o_ref.dtype)


def prepare_actor_params(params, *, use_bf16=True):
    """One-time (init-time) parameter prep, hoisted out of the per-call hot path.

    Casts weights to bf16 by default (MXU-native on v5e/v6e/v7x; halves the weight
    HBM->VMEM DMA and resident weight VMEM). Biases stay f32 so bias-add / relu /
    tanh remain on the f32 VPU/EUP path (required on v5e).

    NOTE: inside the kernel the activations (x, h1, h2) are also cast to the
    weight dtype immediately before each dot, so the bf16 path is "bf16 matmul
    inputs with f32 accumulation" — slightly lossier than bf16-weights-only.
    """
    w1, b1, w2, b2, w3, b3 = params
    if use_bf16:
        w1, w2, w3 = (w.astype(jnp.bfloat16) for w in (w1, w2, w3))
    return (w1, b1, w2, b2, w3, b3)


def _pick_tile_b(batch):
    if batch <= 256:
        # Small / latency-dominated batch: one tile, rounded up to full sublanes.
        return _round_up(max(batch, 1), 8)
    # Large batch: big tiles to amortize per-grid-step overhead, but keep the grid
    # length >= 2 so the "parallel" batch axis shards across both TCs on v7x.
    return min(1024, _round_up(pl.cdiv(batch, 2), 8))


def actor_forward(state, params, max_action, *, tile_b=None):
    """state: (batch, state_dim) f32.
    params: (w1, b1, w2, b2, w3, b3) with W as (in, out) and b as (1, out)
            (optionally prepared via prepare_actor_params).
    Returns (batch, action_dim) f32."""
    w1, b1, w2, b2, w3, b3 = params
    batch, state_dim = state.shape
    hidden = w1.shape[1]
    action_dim = w3.shape[1]

    if tile_b is None:
        tile_b = _pick_tile_b(batch)
    padded_batch = _round_up(batch, tile_b)
    if padded_batch != batch:
        # NOTE: for a fixed serving batch size, pre-pad/shape the state buffer once
        # outside the hot path so this per-call XLA pad-copy is not emitted.
        state = jnp.pad(state, ((0, padded_batch - batch), (0, 0)))

    grid = (padded_batch // tile_b,)

    # Constant index_map => operand stays resident in VMEM across grid steps.
    resident = lambda shape: pl.BlockSpec(shape, lambda i: (0,) * len(shape))
    kernel = functools.partial(actor_kernel, max_action=max_action)

    out = pl.pallas_call(
        kernel,
        out_shape=jax.ShapeDtypeStruct((padded_batch, action_dim), jnp.float32),
        grid_spec=pltpu.PrefetchScalarGridSpec(
            num_scalar_prefetch=0,
            grid=grid,
            in_specs=[
                pl.BlockSpec((tile_b, state_dim), lambda i: (i, 0)),  # state tile
                resident((state_dim, hidden)),     # W1 (resident across grid)
                resident((1, hidden)),             # b1
                resident((hidden, hidden)),        # W2
                resident((1, hidden)),             # b2
                resident((hidden, action_dim)),    # W3 (last dim == full array dim)
                resident((1, action_dim)),         # b3
            ],
            out_specs=pl.BlockSpec((tile_b, action_dim), lambda i: (i, 0)),
        ),
        compiler_params=pltpu.CompilerParams(
            dimension_semantics=("parallel",),     # shards batch grid across TCs on v7x
            vmem_limit_bytes=32 * 1024 * 1024,     # footprint < 3 MB; safe everywhere
        ),
    )(state, w1, b1, w2, b2, w3, b3)

    if padded_batch != batch:
        out = out[:batch]
    return out


def init_actor_params(key, state_dim, hidden, action_dim):
    """Deterministic init mimicking PyTorch nn.Linear default (uniform +/-1/sqrt(fan_in))."""
    def linear(key, fan_in, fan_out):
        kw, kb = jax.random.split(key)
        bound = 1.0 / jnp.sqrt(jnp.float32(fan_in))
        w = jax.random.uniform(kw, (fan_in, fan_out), jnp.float32, -bound, bound)
        b = jax.random.uniform(kb, (1, fan_out), jnp.float32, -bound, bound)
        return w, b

    k1, k2, k3 = jax.random.split(key, 3)
    w1, b1 = linear(k1, state_dim, hidden)
    w2, b2 = linear(k2, hidden, hidden)
    w3, b3 = linear(k3, hidden, action_dim)
    return (w1, b1, w2, b2, w3, b3)


def actor_reference(state, params, max_action):
    """Pure-JAX f32 reference for correctness check."""
    w1, b1, w2, b2, w3, b3 = params
    w1, w2, w3 = (w.astype(jnp.float32) for w in (w1, w2, w3))
    x = jnp.maximum(state @ w1 + b1, 0.0)
    x = jnp.maximum(x @ w2 + b2, 0.0)
    return jnp.tanh(x @ w3 + b3) * max_action


if __name__ == "__main__":
    batch = 2
    state_dim = 16
    hidden = 256          # matches nn.Linear(state_dim, 256) etc.
    action_dim = 4
    max_action = 2.0

    key = jax.random.PRNGKey(0)
    kp, kx = jax.random.split(key)
    params_f32 = init_actor_params(kp, state_dim, hidden, action_dim)
    # One-time prep (hoisted out of the per-call path); bf16 weights by default.
    params_bf16 = prepare_actor_params(params_f32, use_bf16=True)

    state = jax.random.normal(kx, (batch, state_dim), dtype=jnp.float32)
    ref = actor_reference(state, params_f32, max_action)

    # f32 weights: tight match vs reference.
    out = jax.block_until_ready(actor_forward(state, params_f32, max_action))
    assert out.shape == (batch, action_dim)
    assert jnp.allclose(out, ref, atol=1e-5, rtol=1e-5), "f32 mismatch vs reference"

    # bf16-weight path (default prep): loose tolerance vs f32 reference.
    out_bf16 = jax.block_until_ready(actor_forward(state, params_bf16, max_action))
    assert out_bf16.shape == (batch, action_dim)
    assert jnp.allclose(out_bf16, ref, atol=5e-2, rtol=5e-2), "bf16 mismatch vs reference"

    # Medium batch: exercises the 2-step grid path (v7x 2-TC sharding shape).
    mid_state = jax.random.normal(kx, (300, state_dim), dtype=jnp.float32)
    mid_out = jax.block_until_ready(actor_forward(mid_state, params_f32, max_action))
    mid_ref = actor_reference(mid_state, params_f32, max_action)
    assert mid_out.shape == (300, action_dim)
    assert jnp.allclose(mid_out, mid_ref, atol=1e-5, rtol=1e-5), "mid-batch mismatch"

    # Large batch: exercises the big-tile (1024-row) pipelined path.
    big_state = jax.random.normal(kx, (2048, state_dim), dtype=jnp.float32)
    big_out = jax.block_until_ready(actor_forward(big_state, params_f32, max_action))
    big_ref = actor_reference(big_state, params_f32, max_action)
    assert big_out.shape == (2048, action_dim)
    assert jnp.allclose(big_out, big_ref, atol=1e-5, rtol=1e-5), "big-batch mismatch"

    print("KERNEL_OK")
</pallas_src>

<mosaic_0001>
module attributes {stable_mosaic.version = 11 : i64} {
  func.func @actor_kernel(%arg0: i32, %arg1: memref<8x16xf32, #tpu.memory_space<vmem>>, %arg2: memref<16x256xf32, #tpu.memory_space<vmem>>, %arg3: memref<1x256xf32, #tpu.memory_space<vmem>>, %arg4: memref<256x256xf32, #tpu.memory_space<vmem>>, %arg5: memref<1x256xf32, #tpu.memory_space<vmem>>, %arg6: memref<256x4xf32, #tpu.memory_space<vmem>>, %arg7: memref<1x4xf32, #tpu.memory_space<vmem>>, %arg8: memref<8x4xf32, #tpu.memory_space<vmem>>) attributes {dimension_semantics = [#tpu.dimension_semantics<parallel>], iteration_bounds = array<i64: 1>, scalar_prefetch = 0 : i64, scratch_operands = 0 : i64, tpu.core_type = #tpu.core_type<tc>, window_params = [{transform_indices = @transform_0, window_bounds = array<i64: 8, 16>}, {pipeline_mode = #tpu.pipeline_mode<synchronous>, transform_indices = @transform_1, window_bounds = array<i64: 16, 256>}, {pipeline_mode = #tpu.pipeline_mode<synchronous>, transform_indices = @transform_2, window_bounds = array<i64: 1, 256>}, {pipeline_mode = #tpu.pipeline_mode<synchronous>, transform_indices = @transform_3, window_bounds = array<i64: 256, 256>}, {pipeline_mode = #tpu.pipeline_mode<synchronous>, transform_indices = @transform_4, window_bounds = array<i64: 1, 256>}, {pipeline_mode = #tpu.pipeline_mode<synchronous>, transform_indices = @transform_5, window_bounds = array<i64: 256, 4>}, {pipeline_mode = #tpu.pipeline_mode<synchronous>, transform_indices = @transform_6, window_bounds = array<i64: 1, 4>}, {transform_indices = @transform_7, window_bounds = array<i64: 8, 4>}]} {
    %c0 = arith.constant 0 : index
    %c0_0 = arith.constant 0 : index
    %0 = vector.load %arg1[%c0, %c0_0] : memref<8x16xf32, #tpu.memory_space<vmem>>, vector<8x16xf32>
    %c0_1 = arith.constant 0 : index
    %c0_2 = arith.constant 0 : index
    %1 = vector.load %arg2[%c0_1, %c0_2] : memref<16x256xf32, #tpu.memory_space<vmem>>, vector<16x256xf32>
    %cst = arith.constant dense<0.000000e+00> : vector<8x256xf32>
    %2 = tpu.matmul %0, %1, %cst {dimension_numbers = #tpu.dot_dimension_numbers<[1], [0], [0], [1], [0, 0, 1, 1], [], []>} : vector<8x16xf32>, vector<16x256xf32>, vector<8x256xf32> -> vector<8x256xf32>
    %c0_3 = arith.constant 0 : index
    %c0_4 = arith.constant 0 : index
    %3 = vector.load %arg3[%c0_3, %c0_4] : memref<1x256xf32, #tpu.memory_space<vmem>>, vector<1x256xf32>
    %4 = vector.broadcast %3 : vector<1x256xf32> to vector<8x256xf32>
    %5 = arith.addf %2, %4 : vector<8x256xf32>
    %cst_5 = arith.constant 0.000000e+00 : f32
    %6 = vector.broadcast %cst_5 : f32 to vector<8x256xf32>
    %7 = arith.maximumf %5, %6 : vector<8x256xf32>
    %c0_6 = arith.constant 0 : index
    %c0_7 = arith.constant 0 : index
    %8 = vector.load %arg4[%c0_6, %c0_7] : memref<256x256xf32, #tpu.memory_space<vmem>>, vector<256x256xf32>
    %cst_8 = arith.constant dense<0.000000e+00> : vector<8x256xf32>
    %9 = tpu.matmul %7, %8, %cst_8 {dimension_numbers = #tpu.dot_dimension_numbers<[1], [0], [0], [1], [0, 0, 1, 1], [], []>} : vector<8x256xf32>, vector<256x256xf32>, vector<8x256xf32> -> vector<8x256xf32>
    %c0_9 = arith.constant 0 : index
    %c0_10 = arith.constant 0 : index
    %10 = vector.load %arg5[%c0_9, %c0_10] : memref<1x256xf32, #tpu.memory_space<vmem>>, vector<1x256xf32>
    %11 = vector.broadcast %10 : vector<1x256xf32> to vector<8x256xf32>
    %12 = arith.addf %9, %11 : vector<8x256xf32>
    %cst_11 = arith.constant 0.000000e+00 : f32
    %13 = vector.broadcast %cst_11 : f32 to vector<8x256xf32>
    %14 = arith.maximumf %12, %13 : vector<8x256xf32>
    %c0_12 = arith.constant 0 : index
    %c0_13 = arith.constant 0 : index
    %15 = vector.load %arg6[%c0_12, %c0_13] : memref<256x4xf32, #tpu.memory_space<vmem>>, vector<256x4xf32>
    %cst_14 = arith.constant dense<0.000000e+00> : vector<8x4xf32>
    %16 = tpu.matmul %14, %15, %cst_14 {dimension_numbers = #tpu.dot_dimension_numbers<[1], [0], [0], [1], [0, 0, 1, 1], [], []>} : vector<8x256xf32>, vector<256x4xf32>, vector<8x4xf32> -> vector<8x4xf32>
    %c0_15 = arith.constant 0 : index
    %c0_16 = arith.constant 0 : index
    %17 = vector.load %arg7[%c0_15, %c0_16] : memref<1x4xf32, #tpu.memory_space<vmem>>, vector<1x4xf32>
    %18 = vector.broadcast %17 : vector<1x4xf32> to vector<8x4xf32>
    %19 = arith.addf %16, %18 : vector<8x4xf32>
    %20 = math.tanh %19 : vector<8x4xf32>
    %cst_17 = arith.constant 2.000000e+00 : f32
    %21 = vector.broadcast %cst_17 : f32 to vector<8x4xf32>
    %22 = arith.mulf %20, %21 : vector<8x4xf32>
    %c0_18 = arith.constant 0 : index
    %c0_19 = arith.constant 0 : index
    %23 = vector.load %arg8[%c0_18, %c0_19] : memref<8x4xf32, #tpu.memory_space<vmem>>, vector<8x4xf32>
    tpu.vector_store %arg8[%c0_18, %c0_19], %22 {strides = array<i32>} : memref<8x4xf32, #tpu.memory_space<vmem>>, vector<8x4xf32>,
    return
  }
  func.func @transform_0(%arg0: i32) -> (i32, i32) {
    %c0_i32 = arith.constant 0 : i32
    %c0_i32_0 = arith.constant 0 : i32
    return %arg0, %c0_i32 : i32, i32
  }
  func.func @transform_1(%arg0: i32) -> (i32, i32) {
    %c0_i32 = arith.constant 0 : i32
    %c0_i32_0 = arith.constant 0 : i32
    %c0_i32_1 = arith.constant 0 : i32
    return %c0_i32, %c0_i32_0 : i32, i32
  }
  func.func @transform_2(%arg0: i32) -> (i32, i32) {
    %c0_i32 = arith.constant 0 : i32
    %c0_i32_0 = arith.constant 0 : i32
    %c0_i32_1 = arith.constant 0 : i32
    return %c0_i32, %c0_i32_0 : i32, i32
  }
  func.func @transform_3(%arg0: i32) -> (i32, i32) {
    %c0_i32 = arith.constant 0 : i32
    %c0_i32_0 = arith.constant 0 : i32
    %c0_i32_1 = arith.constant 0 : i32
    return %c0_i32, %c0_i32_0 : i32, i32
  }
  func.func @transform_4(%arg0: i32) -> (i32, i32) {
    %c0_i32 = arith.constant 0 : i32
    %c0_i32_0 = arith.constant 0 : i32
    %c0_i32_1 = arith.constant 0 : i32
    return %c0_i32, %c0_i32_0 : i32, i32
  }
  func.func @transform_5(%arg0: i32) -> (i32, i32) {
    %c0_i32 = arith.constant 0 : i32
    %c0_i32_0 = arith.constant 0 : i32
    %c0_i32_1 = arith.constant 0 : i32
    return %c0_i32, %c0_i32_0 : i32, i32
  }
  func.func @transform_6(%arg0: i32) -> (i32, i32) {
    %c0_i32 = arith.constant 0 : i32
    %c0_i32_0 = arith.constant 0 : i32
    %c0_i32_1 = arith.constant 0 : i32
    return %c0_i32, %c0_i32_0 : i32, i32
  }
  func.func @transform_7(%arg0: i32) -> (i32, i32) {
    %c0_i32 = arith.constant 0 : i32
    %c0_i32_0 = arith.constant 0 : i32
    return %arg0, %c0_i32 : i32, i32
  }
}

</mosaic_0001>

<llo_original>
// kernel: tpu_custom_call.1
$region0: #{tpu_custom_call.1}
  #allocation0 [shape = 'u32[]', space=smem, size = 0x4, offset = 0x4, fixed_abs, tag = 'smem constant byte address 0x4 - core index']
  #allocation1 [shape = 'u32[144,128]{1,0:T(1,128)}', space=vmem, size = 0x12000, scoped, tag = 'internal scratch']
  %s0 = inlined_call_operand.vmem [shape: f32[8,16], index: 0, kind: input, shape index: {}]
  %s1 = inlined_call_operand.vmem [shape: f32[16,256], index: 1, kind: input, shape index: {}]
  %s2 = inlined_call_operand.vmem [shape: f32[1,256], index: 2, kind: input, shape index: {}]
  %s3 = inlined_call_operand.hbm [shape: f32[256,256], index: 3, kind: input, shape index: {}]
  %s4 = inlined_call_operand.vmem [shape: f32[1,256], index: 4, kind: input, shape index: {}]
  %s5 = inlined_call_operand.vmem [shape: f32[256,4], index: 5, kind: input, shape index: {}]
  %s6 = inlined_call_operand.vmem [shape: f32[1,4], index: 6, kind: input, shape index: {}]
  %s7 = inlined_call_operand.vmem [shape: f32[8,4], index: 7, kind: output, shape index: {}]
  %s8 = sld [smem:[#allocation0]]
  $region42: #{tpu_custom_call.1} parent=0
    _
  %s10 = ssub.s32 1, %s8
  %s11 = scalar_select 0, %s10, %s8
  $region1: #{tpu_custom_call.1} parent=0
    #allocation2 [shape = 'u8[262144]{0}', space=vmem, size = 0x40000, scoped, tag = 'input window, operand 3, single buffered']
    #allocation3 [shape = 's32[1]{0}', space=sflag, size = 0x4, scoped, tag = 'scoped memory for tpu_custom_call.1']
    %12 = vsyncpa [#allocation3], 0
    // Predicated region
    $region2: #{tpu_custom_call.1} parent=1 // pred_check
      _
    $region3: #{tpu_custom_call.1} parent=1 // pred_check_branch
      %14 = sbr.rel (0) target = $region5
    $region4: #{tpu_custom_call.1} parent=1 // pred_region
      _
    $region5: #{tpu_custom_call.1} parent=1 // pred_fallthru
      _
    // Predicated region
    $region6: #{tpu_custom_call.1} parent=1 // pred_check
      _
    $region7: #{tpu_custom_call.1} parent=1 // pred_check_branch
      %16 = sbr.rel (0) target = $region9
    $region8: #{tpu_custom_call.1} parent=1 // pred_region
      _
    $region9: #{tpu_custom_call.1} parent=1 // pred_fallthru
      _
    // Predicated region
    $region10: #{tpu_custom_call.1} parent=1 // pred_check
      _
    $region11: #{tpu_custom_call.1} parent=1 // pred_check_branch
      %18 = sbr.rel (0) target = $region13
    $region12: #{tpu_custom_call.1} parent=1 // pred_region
      _
    $region13: #{tpu_custom_call.1} parent=1 // pred_fallthru
      _
    // Predicated region
    $region14: #{tpu_custom_call.1} parent=1 // pred_check
      _
    $region15: #{tpu_custom_call.1} parent=1 // pred_check_branch
      %20 = sbr.rel (0) target = $region17
    $region16: #{tpu_custom_call.1} parent=1 // pred_region
      %s22 = ssub.s32 8192, 8192
      %23 = vsyncadd [#allocation3], %s22
      %s24 = sshll.u32 [#allocation2], 4
      %s25 = int_to_ptr.vmem [resolvable:$true] %s24
      %30 = dma.hbm_to_vmem [thread:$0]  %s3, 8192, %s25, [#allocation3], 256, 256, 16
    $region17: #{tpu_custom_call.1} parent=1 // pred_fallthru
      _
    // Predicated region
    $region18: #{tpu_custom_call.1} parent=1 // pred_check
      _
    $region19: #{tpu_custom_call.1} parent=1 // pred_check_branch
      %32 = sbr.rel (0) target = $region21
    $region20: #{tpu_custom_call.1} parent=1 // pred_region
      _
    $region21: #{tpu_custom_call.1} parent=1 // pred_fallthru
      _
    // Predicated region
    $region22: #{tpu_custom_call.1} parent=1 // pred_check
      _
    $region23: #{tpu_custom_call.1} parent=1 // pred_check_branch
      %34 = sbr.rel (0) target = $region25
    $region24: #{tpu_custom_call.1} parent=1 // pred_region
      _
    $region25: #{tpu_custom_call.1} parent=1 // pred_fallthru
      _
    // Predicated region
    $region26: #{tpu_custom_call.1} parent=1 // pred_check
      _
    $region27: #{tpu_custom_call.1} parent=1 // pred_check_branch
      %36 = sbr.rel (0) target = $region29
    $region28: #{tpu_custom_call.1} parent=1 // pred_region
      _
    $region29: #{tpu_custom_call.1} parent=1 // pred_fallthru
      _
    // Predicated region
    $region30: #{tpu_custom_call.1} parent=1 // pred_check
      _
    $region31: #{tpu_custom_call.1} parent=1 // pred_check_branch
      %38 = sbr.rel (0) target = $region33
    $region32: #{tpu_custom_call.1} parent=1 // pred_region
      %39 = dma.done [#allocation3], 8192
    $region33: #{tpu_custom_call.1} parent=1 // pred_fallthru
      _
    %v40 = vld [vmem:[%s0] sm:$0xff]
    %v41 = vld [vmem:[%s1] sm:$0xff]
    %v42 = vld [vmem:[%s1 + $0x8] sm:$0xff]
    %v43 = vld [vmem:[%s1 + $0x10] sm:$0xff]
    %v44 = vld [vmem:[%s1 + $0x18] sm:$0xff]
    %v45 = vld [vmem:[%s2] sm:$0x3]
    %v47 = vlaneseq
    %v48 = vshrl.u32 %v47, 7
    %v49 = vsub.s32 0, %v48
    %v50 = vrot.slane %v45, %v49
    %v51 = vlaneseq
    %v52 = vshrl.u32 %v51, 7
    %v53 = vsub.s32 1, %v52
    %v54 = vrot.slane %v45, %v53
    %vm57 = vcmask 130048
    %v59 = vsel %vm57, %v40, 0
    %61 = vmatprep.subr.mxu0 %v42
    %62 = vmatpush1.msra.mxu0 %v41
    %63 = vmatprep.subr.mxu0 %v44
    %64 = vmatpush1.msra.mxu0 %v43
    %65 = vmatprep.subr.mxu0 0.0
    %66 = vmatpush1.msra.mxu0 0.0
    %67 = vmatprep.subr.mxu0 0.0
    %68 = vmatpush1.msra.mxu0 0.0
    %69 = vmatprep.subr.mxu0 0.0
    %70 = vmatpush1.msra.mxu0 0.0
    %71 = vmatprep.subr.mxu0 0.0
    %72 = vmatpush1.msra.mxu0 0.0
    %73 = vmatprep.subr.mxu0 0.0
    %74 = vmatpush1.msra.mxu0 0.0
    %75 = vmatprep.subr.mxu0 0.0
    %76 = vmatpush1.msra.mxu0 0.0
    %77 = vmatprep.subr.mxu0 0.0
    %78 = vmatpush1.msra.mxu0 0.0
    %79 = vmatprep.subr.mxu0 0.0
    %80 = vmatpush1.msra.mxu0 0.0
    %81 = vmatprep.subr.mxu0 0.0
    %82 = vmatpush1.msra.mxu0 0.0
    %83 = vmatprep.subr.mxu0 0.0
    %84 = vmatpush1.msra.mxu0 0.0
    %85 = vmatprep.subr.mxu0 0.0
    %86 = vmatpush1.msra.mxu0 0.0
    %87 = vmatprep.subr.mxu0 0.0
    %88 = vmatpush1.msra.mxu0 0.0
    %89 = vmatprep.subr.mxu0 0.0
    %90 = vmatpush1.msra.mxu0 0.0
    %91 = vmatprep.subr.mxu0 0.0
    %92 = vmatpush1.msra.mxu0 0.0
    %93 = vmatprep.subr.mxu0 0.0
    %94 = vmatpush1.msra.mxu0 0.0
    %95 = vmatprep.subr.mxu0 0.0
    %96 = vmatpush1.msra.mxu0 0.0
    %97 = vmatprep.subr.mxu0 0.0
    %98 = vmatpush1.msra.mxu0 0.0
    %99 = vmatprep.subr.mxu0 0.0
    %100 = vmatpush1.msra.mxu0 0.0
    %101 = vmatprep.subr.mxu0 0.0
    %102 = vmatpush1.msra.mxu0 0.0
    %103 = vmatprep.subr.mxu0 0.0
    %104 = vmatpush1.msra.mxu0 0.0
    %105 = vmatprep.subr.mxu0 0.0
    %106 = vmatpush1.msra.mxu0 0.0
    %107 = vmatprep.subr.mxu0 0.0
    %108 = vmatpush1.msra.mxu0 0.0
    %109 = vmatprep.subr.mxu0 0.0
    %110 = vmatpush1.msra.mxu0 0.0
    %111 = vmatprep.subr.mxu0 0.0
    %112 = vmatpush1.msra.mxu0 0.0
    %113 = vmatprep.subr.mxu0 0.0
    %114 = vmatpush1.msra.mxu0 0.0
    %115 = vmatprep.subr.mxu0 0.0
    %116 = vmatpush1.msra.mxu0 0.0
    %117 = vmatprep.subr.mxu0 0.0
    %118 = vmatpush1.msra.mxu0 0.0
    %119 = vmatprep.subr.mxu0 0.0
    %120 = vmatpush1.msra.mxu0 0.0
    %121 = vmatprep.subr.mxu0 0.0
    %122 = vmatpush1.msra.mxu0 0.0
    %123 = vmatprep.subr.mxu0 0.0
    %124 = vmatpush1.msra.mxu0 0.0
    %125 = vmatprep.mubr.f32.mxu0 0.0
    %126 = vmatmul.mubr.f32.gmra.mrb[0].mxu0 %v59
    %v127 = vpop.f32.mrb[0].mxu0
    %v128 = vadd.f32 %v50, %v127
    %v129 = vpop.f32.mrb[0].mxu0
    %v130 = vadd.f32 %v54, %v129
    %131 = vdwg.mxu0
    %v132 = vmax.f32 %v128, 0.0
    %v133 = vmax.f32 %v130, 0.0
    %v134 = vld [vmem:[#allocation2] sm:$0xff]
    %v135 = vld [vmem:[#allocation2 + $0x8] sm:$0xff]
    %v136 = vld [vmem:[#allocation2 + $0x10] sm:$0xff]
    %v137 = vld [vmem:[#allocation2 + $0x18] sm:$0xff]
    %v138 = vld [vmem:[#allocation2 + $0x20] sm:$0xff]
    %v139 = vld [vmem:[#allocation2 + $0x28] sm:$0xff]
    %v140 = vld [vmem:[#allocation2 + $0x30] sm:$0xff]
    %v141 = vld [vmem:[#allocation2 + $0x38] sm:$0xff]
    %v142 = vld [vmem:[#allocation2 + $0x40] sm:$0xff]
    %v143 = vld [vmem:[#allocation2 + $0x48] sm:$0xff]
    %v144 = vld [vmem:[#allocation2 + $0x50] sm:$0xff]
    %v145 = vld [vmem:[#allocation2 + $0x58] sm:$0xff]
    %v146 = vld [vmem:[#allocation2 + $0x60] sm:$0xff]
    %v147 = vld [vmem:[#allocation2 + $0x68] sm:$0xff]
    %v148 = vld [vmem:[#allocation2 + $0x70] sm:$0xff]
    %v149 = vld [vmem:[#allocation2 + $0x78] sm:$0xff]
    %v150 = vld [vmem:[#allocation2 + $0x80] sm:$0xff]
    %v151 = vld [vmem:[#allocation2 + $0x88] sm:$0xff]
    %v152 = vld [vmem:[#allocation2 + $0x90] sm:$0xff]
    %v153 = vld [vmem:[#allocation2 + $0x98] sm:$0xff]
    %v154 = vld [vmem:[#allocation2 + $0xa0] sm:$0xff]
    %v155 = vld [vmem:[#allocation2 + $0xa8] sm:$0xff]
    %v156 = vld [vmem:[#allocation2 + $0xb0] sm:$0xff]
    %v157 = vld [vmem:[#allocation2 + $0xb8] sm:$0xff]
    %v158 = vld [vmem:[#allocation2 + $0xc0] sm:$0xff]
    %v159 = vld [vmem:[#allocation2 + $0xc8] sm:$0xff]
    %v160 = vld [vmem:[#allocation2 + $0xd0] sm:$0xff]
    %v161 = vld [vmem:[#allocation2 + $0xd8] sm:$0xff]
    %v162 = vld [vmem:[#allocation2 + $0xe0] sm:$0xff]
    %v163 = vld [vmem:[#allocation2 + $0xe8] sm:$0xff]
    %v164 = vld [vmem:[#allocation2 + $0xf0] sm:$0xff]
    %v165 = vld [vmem:[#allocation2 + $0xf8] sm:$0xff]
    %v166 = vld [vmem:[#allocation2 + $0x100] sm:$0xff]
    %v167 = vld [vmem:[#allocation2 + $0x108] sm:$0xff]
    %v168 = vld [vmem:[#allocation2 + $0x110] sm:$0xff]
    %v169 = vld [vmem:[#allocation2 + $0x118] sm:$0xff]
    %v170 = vld [vmem:[#allocation2 + $0x120] sm:$0xff]
    %v171 = vld [vmem:[#allocation2 + $0x128] sm:$0xff]
    %v172 = vld [vmem:[#allocation2 + $0x130] sm:$0xff]
    %v173 = vld [vmem:[#allocation2 + $0x138] sm:$0xff]
    %v174 = vld [vmem:[#allocation2 + $0x140] sm:$0xff]
    %v175 = vld [vmem:[#allocation2 + $0x148] sm:$0xff]
    %v176 = vld [vmem:[#allocation2 + $0x150] sm:$0xff]
    %v177 = vld [vmem:[#allocation2 + $0x158] sm:$0xff]
    %v178 = vld [vmem:[#allocation2 + $0x160] sm:$0xff]
    %v179 = vld [vmem:[#allocation2 + $0x168] sm:$0xff]
    %v180 = vld [vmem:[#allocation2 + $0x170] sm:$0xff]
    %v181 = vld [vmem:[#allocation2 + $0x178] sm:$0xff]
    %v182 = vld [vmem:[#allocation2 + $0x180] sm:$0xff]
    %v183 = vld [vmem:[#allocation2 + $0x188] sm:$0xff]
    %v184 = vld [vmem:[#allocation2 + $0x190] sm:$0xff]
    %v185 = vld [vmem:[#allocation2 + $0x198] sm:$0xff]
    %v186 = vld [vmem:[#allocation2 + $0x1a0] sm:$0xff]
    %v187 = vld [vmem:[#allocation2 + $0x1a8] sm:$0xff]
    %v188 = vld [vmem:[#allocation2 + $0x1b0] sm:$0xff]
    %v189 = vld [vmem:[#allocation2 + $0x1b8] sm:$0xff]
    %v190 = vld [vmem:[#allocation2 + $0x1c0] sm:$0xff]
    %v191 = vld [vmem:[#allocation2 + $0x1c8] sm:$0xff]
    %v192 = vld [vmem:[#allocation2 + $0x1d0] sm:$0xff]
    %v193 = vld [vmem:[#allocation2 + $0x1d8] sm:$0xff]
    %v194 = vld [vmem:[#allocation2 + $0x1e0] sm:$0xff]
    %v195 = vld [vmem:[#allocation2 + $0x1e8] sm:$0xff]
    %v196 = vld [vmem:[#allocation2 + $0x1f0] sm:$0xff]
    %v197 = vld [vmem:[#allocation2 + $0x1f8] sm:$0xff]
    %v198 = vld [vmem:[%s4] sm:$0x3]
    %v200 = vlaneseq
    %v201 = vshrl.u32 %v200, 7
    %v202 = vsub.s32 0, %v201
    %v203 = vrot.slane %v198, %v202
    %v204 = vlaneseq
    %v205 = vshrl.u32 %v204, 7
    %v206 = vsub.s32 1, %v205
    %v207 = vrot.slane %v198, %v206
    %210 = vmatprep.subr.mxu0 %v135
    %211 = vmatpush1.msra.mxu0 %v134
    %212 = vmatprep.subr.mxu0 %v137
    %213 = vmatpush1.msra.mxu0 %v136
    %214 = vmatprep.subr.mxu0 %v139
    %215 = vmatpush1.msra.mxu0 %v138
    %216 = vmatprep.subr.mxu0 %v141
    %217 = vmatpush1.msra.mxu0 %v140
    %218 = vmatprep.subr.mxu0 %v143
    %219 = vmatpush1.msra.mxu0 %v142
    %220 = vmatprep.subr.mxu0 %v145
    %221 = vmatpush1.msra.mxu0 %v144
    %222 = vmatprep.subr.mxu0 %v147
    %223 = vmatpush1.msra.mxu0 %v146
    %224 = vmatprep.subr.mxu0 %v149
    %225 = vmatpush1.msra.mxu0 %v148
    %226 = vmatprep.subr.mxu0 %v151
    %227 = vmatpush1.msra.mxu0 %v150
    %228 = vmatprep.subr.mxu0 %v153
    %229 = vmatpush1.msra.mxu0 %v152
    %230 = vmatprep.subr.mxu0 %v155
    %231 = vmatpush1.msra.mxu0 %v154
    %232 = vmatprep.subr.mxu0 %v157
    %233 = vmatpush1.msra.mxu0 %v156
    %234 = vmatprep.subr.mxu0 %v159
    %235 = vmatpush1.msra.mxu0 %v158
    %236 = vmatprep.subr.mxu0 %v161
    %237 = vmatpush1.msra.mxu0 %v160
    %238 = vmatprep.subr.mxu0 %v163
    %239 = vmatpush1.msra.mxu0 %v162
    %240 = vmatprep.subr.mxu0 %v165
    %241 = vmatpush1.msra.mxu0 %v164
    %242 = vmatprep.subr.mxu0 %v167
    %243 = vmatpush1.msra.mxu0 %v166
    %244 = vmatprep.subr.mxu0 %v169
    %245 = vmatpush1.msra.mxu0 %v168
    %246 = vmatprep.subr.mxu0 %v171
    %247 = vmatpush1.msra.mxu0 %v170
    %248 = vmatprep.subr.mxu0 %v173
    %249 = vmatpush1.msra.mxu0 %v172
    %250 = vmatprep.subr.mxu0 %v175
    %251 = vmatpush1.msra.mxu0 %v174
    %252 = vmatprep.subr.mxu0 %v177
    %253 = vmatpush1.msra.mxu0 %v176
    %254 = vmatprep.subr.mxu0 %v179
    %255 = vmatpush1.msra.mxu0 %v178
    %256 = vmatprep.subr.mxu0 %v181
    %257 = vmatpush1.msra.mxu0 %v180
    %258 = vmatprep.subr.mxu0 %v183
    %259 = vmatpush1.msra.mxu0 %v182
    %260 = vmatprep.subr.mxu0 %v185
    %261 = vmatpush1.msra.mxu0 %v184
    %262 = vmatprep.subr.mxu0 %v187
    %263 = vmatpush1.msra.mxu0 %v186
    %264 = vmatprep.subr.mxu0 %v189
    %265 = vmatpush1.msra.mxu0 %v188
    %266 = vmatprep.subr.mxu0 %v191
    %267 = vmatpush1.msra.mxu0 %v190
    %268 = vmatprep.subr.mxu0 %v193
    %269 = vmatpush1.msra.mxu0 %v192
    %270 = vmatprep.subr.mxu0 %v195
    %271 = vmatpush1.msra.mxu0 %v194
    %272 = vmatprep.subr.mxu0 %v197
    %273 = vmatpush1.msra.mxu0 %v196
    %274 = vmatprep.mubr.f32.mxu0 %v133
    %275 = vmatmul.mubr.f32.gmra.mrb[0].mxu0 %v132
    %v276 = vpop.f32.mrb[0].mxu0
    %v277 = vadd.f32 %v203, %v276
    %v278 = vpop.f32.mrb[0].mxu0
    %v279 = vadd.f32 %v207, %v278
    %280 = vdwg.mxu0
    %v281 = vmax.f32 %v277, 0.0
    %v282 = vmax.f32 %v279, 0.0
    %v283 = vld [vmem:[%s5] sm:$0xff]
    %v284 = vld [vmem:[%s5 + $0x8] sm:$0xff]
    %v285 = vld [vmem:[%s5 + $0x10] sm:$0xff]
    %v286 = vld [vmem:[%s5 + $0x18] sm:$0xff]
    %v287 = vld [vmem:[%s5 + $0x20] sm:$0xff]
    %v288 = vld [vmem:[%s5 + $0x28] sm:$0xff]
    %v289 = vld [vmem:[%s5 + $0x30] sm:$0xff]
    %v290 = vld [vmem:[%s5 + $0x38] sm:$0xff]
    %v291 = vld [vmem:[%s5 + $0x40] sm:$0xff]
    %v292 = vld [vmem:[%s5 + $0x48] sm:$0xff]
    %v293 = vld [vmem:[%s5 + $0x50] sm:$0xff]
    %v294 = vld [vmem:[%s5 + $0x58] sm:$0xff]
    %v295 = vld [vmem:[%s5 + $0x60] sm:$0xff]
    %v296 = vld [vmem:[%s5 + $0x68] sm:$0xff]
    %v297 = vld [vmem:[%s5 + $0x70] sm:$0xff]
    %v298 = vld [vmem:[%s5 + $0x78] sm:$0xff]
    %v299 = vld [vmem:[%s5 + $0x80] sm:$0xff]
    %v300 = vld [vmem:[%s5 + $0x88] sm:$0xff]
    %v301 = vld [vmem:[%s5 + $0x90] sm:$0xff]
    %v302 = vld [vmem:[%s5 + $0x98] sm:$0xff]
    %v303 = vld [vmem:[%s5 + $0xa0] sm:$0xff]
    %v304 = vld [vmem:[%s5 + $0xa8] sm:$0xff]
    %v305 = vld [vmem:[%s5 + $0xb0] sm:$0xff]
    %v306 = vld [vmem:[%s5 + $0xb8] sm:$0xff]
    %v307 = vld [vmem:[%s5 + $0xc0] sm:$0xff]
    %v308 = vld [vmem:[%s5 + $0xc8] sm:$0xff]
    %v309 = vld [vmem:[%s5 + $0xd0] sm:$0xff]
    %v310 = vld [vmem:[%s5 + $0xd8] sm:$0xff]
    %v311 = vld [vmem:[%s5 + $0xe0] sm:$0xff]
    %v312 = vld [vmem:[%s5 + $0xe8] sm:$0xff]
    %v313 = vld [vmem:[%s5 + $0xf0] sm:$0xff]
    %v314 = vld [vmem:[%s5 + $0xf8] sm:$0xff]
    %v315 = vld [vmem:[%s6] sm:$0x1]
    %v317 = vlaneseq
    %v318 = vshrl.u32 %v317, 7
    %v319 = vsub.s32 0, %v318
    %v320 = vrot.slane %v315, %v319
    %322 = vmatprep.subr.mxu0 0.0
    %323 = vmatpush1.msra.mxu0 %v283
    %324 = vmatprep.subr.mxu0 0.0
    %325 = vmatpush1.msra.mxu0 %v284
    %326 = vmatprep.subr.mxu0 0.0
    %327 = vmatpush1.msra.mxu0 %v285
    %328 = vmatprep.subr.mxu0 0.0
    %329 = vmatpush1.msra.mxu0 %v286
    %330 = vmatprep.subr.mxu0 0.0
    %331 = vmatpush1.msra.mxu0 %v287
    %332 = vmatprep.subr.mxu0 0.0
    %333 = vmatpush1.msra.mxu0 %v288
    %334 = vmatprep.subr.mxu0 0.0
    %335 = vmatpush1.msra.mxu0 %v289
    %336 = vmatprep.subr.mxu0 0.0
    %337 = vmatpush1.msra.mxu0 %v290
    %338 = vmatprep.subr.mxu0 0.0
    %339 = vmatpush1.msra.mxu0 %v291
    %340 = vmatprep.subr.mxu0 0.0
    %341 = vmatpush1.msra.mxu0 %v292
    %342 = vmatprep.subr.mxu0 0.0
    %343 = vmatpush1.msra.mxu0 %v293
    %344 = vmatprep.subr.mxu0 0.0
    %345 = vmatpush1.msra.mxu0 %v294
    %346 = vmatprep.subr.mxu0 0.0
    %347 = vmatpush1.msra.mxu0 %v295
    %348 = vmatprep.subr.mxu0 0.0
    %349 = vmatpush1.msra.mxu0 %v296
    %350 = vmatprep.subr.mxu0 0.0
    %351 = vmatpush1.msra.mxu0 %v297
    %352 = vmatprep.subr.mxu0 0.0
    %353 = vmatpush1.msra.mxu0 %v298
    %354 = vmatprep.subr.mxu0 0.0
    %355 = vmatpush1.msra.mxu0 %v299
    %356 = vmatprep.subr.mxu0 0.0
    %357 = vmatpush1.msra.mxu0 %v300
    %358 = vmatprep.subr.mxu0 0.0
    %359 = vmatpush1.msra.mxu0 %v301
    %360 = vmatprep.subr.mxu0 0.0
    %361 = vmatpush1.msra.mxu0 %v302
    %362 = vmatprep.subr.mxu0 0.0
    %363 = vmatpush1.msra.mxu0 %v303
    %364 = vmatprep.subr.mxu0 0.0
    %365 = vmatpush1.msra.mxu0 %v304
    %366 = vmatprep.subr.mxu0 0.0
    %367 = vmatpush1.msra.mxu0 %v305
    %368 = vmatprep.subr.mxu0 0.0
    %369 = vmatpush1.msra.mxu0 %v306
    %370 = vmatprep.subr.mxu0 0.0
    %371 = vmatpush1.msra.mxu0 %v307
    %372 = vmatprep.subr.mxu0 0.0
    %373 = vmatpush1.msra.mxu0 %v308
    %374 = vmatprep.subr.mxu0 0.0
    %375 = vmatpush1.msra.mxu0 %v309
    %376 = vmatprep.subr.mxu0 0.0
    %377 = vmatpush1.msra.mxu0 %v310
    %378 = vmatprep.subr.mxu0 0.0
    %379 = vmatpush1.msra.mxu0 %v311
    %380 = vmatprep.subr.mxu0 0.0
    %381 = vmatpush1.msra.mxu0 %v312
    %382 = vmatprep.subr.mxu0 0.0
    %383 = vmatpush1.msra.mxu0 %v313
    %384 = vmatprep.subr.mxu0 0.0
    %385 = vmatpush1.msra.mxu0 %v314
    %386 = vmatprep.mubr.f32.mxu0 %v282
    %387 = vmatmul.mubr.f32.gmra.mrb[0].mxu0 %v281
    %v388 = vpop.f32.mrb[0].mxu0
    %v389 = vadd.f32 %v320, %v388
    %v390 = vpop.f32.mrb[0].mxu0
    %391 = vdwg.mxu0
    %v392 = vtanh.pop %v389
    %v393 = vmul.f32 %v392, 2.0
    %vm394 = vcmask 31744
    %395 = vst.msk [vmem:[%s7] sm:$0xff] %vm394, %v393
    // Predicated region
    $region34: #{tpu_custom_call.1} parent=1 // pred_check
      _
    $region35: #{tpu_custom_call.1} parent=1 // pred_check_branch
      %397 = sbr.rel (0) target = $region37
    $region36: #{tpu_custom_call.1} parent=1 // pred_region
      _
    $region37: #{tpu_custom_call.1} parent=1 // pred_fallthru
      _
    // Predicated region
    $region38: #{tpu_custom_call.1} parent=1 // pred_check
      _
    $region39: #{tpu_custom_call.1} parent=1 // pred_check_branch
      %399 = sbr.rel (0) target = $region41
    $region40: #{tpu_custom_call.1} parent=1 // pred_region
      _
    $region41: #{tpu_custom_call.1} parent=1 // pred_fallthru
      _
    %400 = vsyncpa [#allocation3], 1

</llo_original>
